<compile_context>
chip_gen: v7x
topology: tpu7x:2x2x1
jax: 0.10.0
libtpu: 0.0.40
codegen_flags: <defaults>
</compile_context>

<pallas_src>
import math
import functools

import jax
import jax.numpy as jnp
from jax import lax
from jax.experimental import pallas as pl
from jax.experimental.pallas import tpu as pltpu


def _mha_kernel(q_ref, k_ref, v_ref, w_ref, o_ref, kp_ref, vp_ref, *,
                head, d_k, scale):
    # q_ref: (1, tq, D) query tile for one batch element
    # k_ref/v_ref: (1, S, D) full key/value sequence for this batch element
    # w_ref: (3, D, D) bf16, packed [W_q^T, W_k^T, W_v^T]
    # o_ref: (1, tq, D) lane-dense output tile
    # kp_ref/vp_ref: (S, D) bf16 VMEM scratch holding the K/V projections
    qi = pl.program_id(1)

    # K/V projections computed once per batch element; resident across query tiles.
    @pl.when(qi == 0)
    def _():
        x_k = k_ref[0].astype(jnp.bfloat16)                       # (S, D)
        x_v = v_ref[0].astype(jnp.bfloat16)
        kp_ref[...] = jnp.dot(x_k, w_ref[1],
                              preferred_element_type=jnp.float32).astype(jnp.bfloat16)
        vp_ref[...] = jnp.dot(x_v, w_ref[2],
                              preferred_element_type=jnp.float32).astype(jnp.bfloat16)

    # Query projection for this tile; fold the 1/sqrt(d_k) scale into Q here
    # (S*D multiplies instead of an S*S divide per head).
    x_q = q_ref[0].astype(jnp.bfloat16)                           # (tq, D)
    q_proj = jnp.dot(x_q, w_ref[0], preferred_element_type=jnp.float32)
    q_proj = (q_proj * scale).astype(jnp.bfloat16)

    k_proj = kp_ref[...]                                          # (S, D) bf16
    v_proj = vp_ref[...]

    outs = []
    for h in range(head):                                         # static unroll
        qh = q_proj[:, h * d_k:(h + 1) * d_k]                     # (tq, d_k)
        kh = k_proj[:, h * d_k:(h + 1) * d_k]                     # (S,  d_k)
        vh = v_proj[:, h * d_k:(h + 1) * d_k]

        # scores = (Q / sqrt(d_k)) K^T: contract last dims directly (no kh.T).
        s = lax.dot_general(qh, kh, (((1,), (1,)), ((), ())),
                            preferred_element_type=jnp.float32)   # (tq, S) f32

        # f32 softmax; denominator reciprocal goes to the EUP slot.
        m = jnp.max(s, axis=-1, keepdims=True)
        e = jnp.exp(s - m)
        p = e * pl.reciprocal(jnp.sum(e, axis=-1, keepdims=True), approx=True)

        outs.append(jnp.dot(p.astype(jnp.bfloat16), vh,
                            preferred_element_type=jnp.float32))  # (tq, d_k) f32

    # Single lane-dense store of the whole (tq, D) tile.
    o_ref[0] = jnp.concatenate(outs, axis=-1)

    # TODO(synk): optional `mask` argument (masked_fill_ with -finfo.max before softmax)
    #             not implemented; this covers the mask=None path of the reference module.


def multi_head_attention(q, k, v, w_q, w_k, w_v, *, head, block_q=None):
    """q, k, v: (B, S, D) float32. w_*: (D, D) nn.Linear weights (out_features, in_features)."""
    B, S, D = q.shape
    assert D % head == 0
    d_k = D // head

    if block_q is None:
        block_q = 128 if (S % 128 == 0) else S
    assert S % block_q == 0
    n_q = S // block_q

    # nn.Linear computes x @ W^T: pre-transpose and pack the three weights into one
    # bf16 (3, D, D) operand (single weight input stream, half the weight VMEM/DMA).
    w_qkv = jnp.stack([w_q.T, w_k.T, w_v.T]).astype(jnp.bfloat16)

    kernel = functools.partial(_mha_kernel, head=head, d_k=d_k,
                               scale=1.0 / math.sqrt(d_k))

    attn = pl.pallas_call(
        kernel,
        out_shape=jax.ShapeDtypeStruct((B, S, D), jnp.float32),
        grid_spec=pltpu.PrefetchScalarGridSpec(
            num_scalar_prefetch=0,
            grid=(B, n_q),
            in_specs=[
                pl.BlockSpec((1, block_q, D), lambda b, qi: (b, qi, 0)),  # q tile
                pl.BlockSpec((1, S, D), lambda b, qi: (b, 0, 0)),          # k (full seq)
                pl.BlockSpec((1, S, D), lambda b, qi: (b, 0, 0)),          # v (full seq)
                pl.BlockSpec((3, D, D), lambda b, qi: (0, 0, 0)),          # packed W_qkv^T
            ],
            out_specs=pl.BlockSpec((1, block_q, D), lambda b, qi: (b, qi, 0)),
            scratch_shapes=[
                pltpu.VMEM((S, D), jnp.bfloat16),   # K projection (resident per batch)
                pltpu.VMEM((S, D), jnp.bfloat16),   # V projection (resident per batch)
            ],
        ),
        compiler_params=pltpu.CompilerParams(
            dimension_semantics=("parallel", "arbitrary")),
    )(q, k, v, w_qkv)

    # Reproduce the module's chunk(dim=0)/cat(dim=2) epilogue as one fused
    # reshape/transpose chain on the lane-dense (B, S, D) kernel output.
    out = (attn.reshape(B, S, head, d_k)     # standard per-head layout
               .transpose(0, 2, 1, 3)        # (B, H, S, d_k)
               .reshape(B * head, S, d_k)    # torch .view: flat index = b*head + h
               .reshape(head, B, S, d_k)     # torch.chunk(head, dim=0)
               .transpose(1, 2, 0, 3)        # gather chunks per (batch, seq)
               .reshape(B, S, D))            # torch.cat(dim=2)
    return out


def _reference(q, k, v, w_q, w_k, w_v, *, head):
    """Pure-JAX (f32) transcription of the PyTorch forward for verification."""
    B, S, D = q.shape
    d_k = D // head
    qp = (q @ w_q.T).reshape(B, S, head, d_k).transpose(0, 2, 1, 3).reshape(B * head, S, d_k)
    kp = (k @ w_k.T).reshape(B, S, head, d_k).transpose(0, 2, 1, 3).reshape(B * head, S, d_k)
    vp = (v @ w_v.T).reshape(B, S, head, d_k).transpose(0, 2, 1, 3).reshape(B * head, S, d_k)
    s = jnp.einsum("bqd,bkd->bqk", qp, kp) / math.sqrt(d_k)
    p = jax.nn.softmax(s, axis=2)
    ao = jnp.einsum("bqk,bkd->bqd", p, vp)
    chunks = [ao[c * B:(c + 1) * B] for c in range(head)]
    return jnp.concatenate(chunks, axis=2)


if __name__ == "__main__":
    B, S, D, HEAD = 2, 8, 32, 4

    key = jax.random.PRNGKey(0)
    kq, kk, kv, kwq, kwk, kwv = jax.random.split(key, 6)

    q = jax.random.normal(kq, (B, S, D), dtype=jnp.float32)
    k = jax.random.normal(kk, (B, S, D), dtype=jnp.float32)
    v = jax.random.normal(kv, (B, S, D), dtype=jnp.float32)

    # Deterministic nn.Linear-style init: U(-1/sqrt(D), 1/sqrt(D)), shape (out, in).
    bound = 1.0 / math.sqrt(D)
    w_q = jax.random.uniform(kwq, (D, D), jnp.float32, -bound, bound)
    w_k = jax.random.uniform(kwk, (D, D), jnp.float32, -bound, bound)
    w_v = jax.random.uniform(kwv, (D, D), jnp.float32, -bound, bound)

    out = multi_head_attention(q, k, v, w_q, w_k, w_v, head=HEAD)
    out = jax.block_until_ready(out)

    ref = _reference(q, k, v, w_q, w_k, w_v, head=HEAD)
    assert out.shape == (B, S, D), out.shape
    # bf16 MXU operands + approx-reciprocal softmax -> slightly looser tolerance vs f32 ref.
    assert jnp.allclose(out, ref, atol=2e-2, rtol=2e-2), "mismatch vs reference"

    print("KERNEL_OK")
</pallas_src>

<mosaic_0001>
module attributes {stable_mosaic.version = 11 : i64} {
  func.func @_mha_kernel(%arg0: i32, %arg1: i32, %arg2: memref<1x8x32xf32, #tpu.memory_space<vmem>>, %arg3: memref<1x8x32xf32, #tpu.memory_space<vmem>>, %arg4: memref<1x8x32xf32, #tpu.memory_space<vmem>>, %arg5: memref<3x32x32xbf16, #tpu.memory_space<vmem>>, %arg6: memref<1x8x32xf32, #tpu.memory_space<vmem>>, %arg7: memref<8x32xbf16, #tpu.memory_space<vmem>>, %arg8: memref<8x32xbf16, #tpu.memory_space<vmem>>) attributes {dimension_semantics = [#tpu.dimension_semantics<parallel>, #tpu.dimension_semantics<arbitrary>], iteration_bounds = array<i64: 2, 1>, scalar_prefetch = 0 : i64, scratch_operands = 2 : i64, tpu.core_type = #tpu.core_type<tc>, window_params = [{transform_indices = @transform_0, window_bounds = array<i64: 1, 8, 32>}, {transform_indices = @transform_1, window_bounds = array<i64: 1, 8, 32>}, {transform_indices = @transform_2, window_bounds = array<i64: 1, 8, 32>}, {pipeline_mode = #tpu.pipeline_mode<synchronous>, transform_indices = @transform_3, window_bounds = array<i64: 3, 32, 32>}, {transform_indices = @transform_4, window_bounds = array<i64: 1, 8, 32>}]} {
    %c0_i32 = arith.constant 0 : i32
    %0 = arith.cmpi eq, %arg1, %c0_i32 : i32
    %1 = arith.extui %0 : i1 to i32
    %c0_i32_0 = arith.constant 0 : i32
    %2 = arith.cmpi ne, %1, %c0_i32_0 : i32
    scf.if %2 {
      %c0_30 = arith.constant 0 : index
      %c0_31 = arith.constant 0 : index
      %c0_32 = arith.constant 0 : index
      %82 = vector.load %arg3[%c0_30, %c0_31, %c0_32] : memref<1x8x32xf32, #tpu.memory_space<vmem>>, vector<1x8x32xf32>
      %83 = vector.shape_cast %82 : vector<1x8x32xf32> to vector<8x32xf32>
      %84 = arith.truncf %83 : vector<8x32xf32> to vector<8x32xbf16>
      %c0_33 = arith.constant 0 : index
      %c0_34 = arith.constant 0 : index
      %c0_35 = arith.constant 0 : index
      %85 = vector.load %arg4[%c0_33, %c0_34, %c0_35] : memref<1x8x32xf32, #tpu.memory_space<vmem>>, vector<1x8x32xf32>
      %86 = vector.shape_cast %85 : vector<1x8x32xf32> to vector<8x32xf32>
      %87 = arith.truncf %86 : vector<8x32xf32> to vector<8x32xbf16>
      %c1 = arith.constant 1 : index
      %c0_36 = arith.constant 0 : index
      %c0_37 = arith.constant 0 : index
      %88 = vector.load %arg5[%c1, %c0_36, %c0_37] : memref<3x32x32xbf16, #tpu.memory_space<vmem>>, vector<1x32x32xbf16>
      %89 = vector.shape_cast %88 : vector<1x32x32xbf16> to vector<32x32xbf16>
      %cst_38 = arith.constant dense<0.000000e+00> : vector<8x32xf32>
      %90 = tpu.matmul %84, %89, %cst_38 {dimension_numbers = #tpu.dot_dimension_numbers<[1], [0], [0], [1], [0, 0, 1, 1], [], []>} : vector<8x32xbf16>, vector<32x32xbf16>, vector<8x32xf32> -> vector<8x32xf32>
      %91 = arith.truncf %90 : vector<8x32xf32> to vector<8x32xbf16>
      %c0_39 = arith.constant 0 : index
      %c0_40 = arith.constant 0 : index
      %92 = vector.load %arg7[%c0_39, %c0_40] : memref<8x32xbf16, #tpu.memory_space<vmem>>, vector<8x32xbf16>
      tpu.vector_store %arg7[%c0_39, %c0_40], %91 {strides = array<i32>} : memref<8x32xbf16, #tpu.memory_space<vmem>>, vector<8x32xbf16>,
      %c2 = arith.constant 2 : index
      %c0_41 = arith.constant 0 : index
      %c0_42 = arith.constant 0 : index
      %93 = vector.load %arg5[%c2, %c0_41, %c0_42] : memref<3x32x32xbf16, #tpu.memory_space<vmem>>, vector<1x32x32xbf16>
      %94 = vector.shape_cast %93 : vector<1x32x32xbf16> to vector<32x32xbf16>
      %cst_43 = arith.constant dense<0.000000e+00> : vector<8x32xf32>
      %95 = tpu.matmul %87, %94, %cst_43 {dimension_numbers = #tpu.dot_dimension_numbers<[1], [0], [0], [1], [0, 0, 1, 1], [], []>} : vector<8x32xbf16>, vector<32x32xbf16>, vector<8x32xf32> -> vector<8x32xf32>
      %96 = arith.truncf %95 : vector<8x32xf32> to vector<8x32xbf16>
      %c0_44 = arith.constant 0 : index
      %c0_45 = arith.constant 0 : index
      %97 = vector.load %arg8[%c0_44, %c0_45] : memref<8x32xbf16, #tpu.memory_space<vmem>>, vector<8x32xbf16>
      tpu.vector_store %arg8[%c0_44, %c0_45], %96 {strides = array<i32>} : memref<8x32xbf16, #tpu.memory_space<vmem>>, vector<8x32xbf16>,
    } else {
    }
    %c0 = arith.constant 0 : index
    %c0_1 = arith.constant 0 : index
    %c0_2 = arith.constant 0 : index
    %3 = vector.load %arg2[%c0, %c0_1, %c0_2] : memref<1x8x32xf32, #tpu.memory_space<vmem>>, vector<1x8x32xf32>
    %4 = vector.shape_cast %3 : vector<1x8x32xf32> to vector<8x32xf32>
    %5 = arith.truncf %4 : vector<8x32xf32> to vector<8x32xbf16>
    %c0_3 = arith.constant 0 : index
    %c0_4 = arith.constant 0 : index
    %c0_5 = arith.constant 0 : index
    %6 = vector.load %arg5[%c0_3, %c0_4, %c0_5] : memref<3x32x32xbf16, #tpu.memory_space<vmem>>, vector<1x32x32xbf16>
    %7 = vector.shape_cast %6 : vector<1x32x32xbf16> to vector<32x32xbf16>
    %cst = arith.constant dense<0.000000e+00> : vector<8x32xf32>
    %8 = tpu.matmul %5, %7, %cst {dimension_numbers = #tpu.dot_dimension_numbers<[1], [0], [0], [1], [0, 0, 1, 1], [], []>} : vector<8x32xbf16>, vector<32x32xbf16>, vector<8x32xf32> -> vector<8x32xf32>
    %cst_6 = arith.constant 0.353553385 : f32
    %9 = vector.broadcast %cst_6 : f32 to vector<8x32xf32>
    %10 = arith.mulf %8, %9 : vector<8x32xf32>
    %11 = arith.truncf %10 : vector<8x32xf32> to vector<8x32xbf16>
    %c0_7 = arith.constant 0 : index
    %c0_8 = arith.constant 0 : index
    %12 = vector.load %arg7[%c0_7, %c0_8] : memref<8x32xbf16, #tpu.memory_space<vmem>>, vector<8x32xbf16>
    %c0_9 = arith.constant 0 : index
    %c0_10 = arith.constant 0 : index
    %13 = vector.load %arg8[%c0_9, %c0_10] : memref<8x32xbf16, #tpu.memory_space<vmem>>, vector<8x32xbf16>
    %14 = vector.extract_strided_slice %11 {offsets = [0, 0], sizes = [8, 8], strides = [1, 1]} : vector<8x32xbf16> to vector<8x8xbf16>
    %15 = vector.extract_strided_slice %12 {offsets = [0, 0], sizes = [8, 8], strides = [1, 1]} : vector<8x32xbf16> to vector<8x8xbf16>
    %16 = vector.extract_strided_slice %13 {offsets = [0, 0], sizes = [8, 8], strides = [1, 1]} : vector<8x32xbf16> to vector<8x8xbf16>
    %cst_11 = arith.constant dense<0.000000e+00> : vector<8x8xf32>
    %17 = tpu.matmul %14, %15, %cst_11 {dimension_numbers = #tpu.dot_dimension_numbers<[1], [1], [0], [0], [0, 0, 1, 0], [], []>} : vector<8x8xbf16>, vector<8x8xbf16>, vector<8x8xf32> -> vector<8x8xf32>
    %cst_12 = arith.constant dense<0xFF800000> : vector<8xf32>
    %18 = vector.multi_reduction <maximumf>, %17, %cst_12 [1] : vector<8x8xf32> to vector<8xf32>
    %19 = vector.shape_cast %18 : vector<8xf32> to vector<8x1xf32>
    %20 = vector.broadcast %19 : vector<8x1xf32> to vector<8x8xf32>
    %21 = arith.subf %17, %20 : vector<8x8xf32>
    %22 = math.exp %21 : vector<8x8xf32>
    %cst_13 = arith.constant dense<0.000000e+00> : vector<8xf32>
    %23 = vector.multi_reduction <add>, %22, %cst_13 [1] : vector<8x8xf32> to vector<8xf32>
    %24 = vector.shape_cast %23 : vector<8xf32> to vector<8x1xf32>
    %25 = tpu.reciprocal %24 {approx = true} : vector<8x1xf32> -> vector<8x1xf32>
    %26 = vector.broadcast %25 : vector<8x1xf32> to vector<8x8xf32>
    %27 = arith.mulf %22, %26 : vector<8x8xf32>
    %28 = arith.truncf %27 : vector<8x8xf32> to vector<8x8xbf16>
    %cst_14 = arith.constant dense<0.000000e+00> : vector<8x8xf32>
    %29 = tpu.matmul %28, %16, %cst_14 {dimension_numbers = #tpu.dot_dimension_numbers<[1], [0], [0], [1], [0, 0, 1, 1], [], []>} : vector<8x8xbf16>, vector<8x8xbf16>, vector<8x8xf32> -> vector<8x8xf32>
    %30 = vector.extract_strided_slice %11 {offsets = [0, 8], sizes = [8, 8], strides = [1, 1]} : vector<8x32xbf16> to vector<8x8xbf16>
    %31 = vector.extract_strided_slice %12 {offsets = [0, 8], sizes = [8, 8], strides = [1, 1]} : vector<8x32xbf16> to vector<8x8xbf16>
    %32 = vector.extract_strided_slice %13 {offsets = [0, 8], sizes = [8, 8], strides = [1, 1]} : vector<8x32xbf16> to vector<8x8xbf16>
    %cst_15 = arith.constant dense<0.000000e+00> : vector<8x8xf32>
    %33 = tpu.matmul %30, %31, %cst_15 {dimension_numbers = #tpu.dot_dimension_numbers<[1], [1], [0], [0], [0, 0, 1, 0], [], []>} : vector<8x8xbf16>, vector<8x8xbf16>, vector<8x8xf32> -> vector<8x8xf32>
    %cst_16 = arith.constant dense<0xFF800000> : vector<8xf32>
    %34 = vector.multi_reduction <maximumf>, %33, %cst_16 [1] : vector<8x8xf32> to vector<8xf32>
    %35 = vector.shape_cast %34 : vector<8xf32> to vector<8x1xf32>
    %36 = vector.broadcast %35 : vector<8x1xf32> to vector<8x8xf32>
    %37 = arith.subf %33, %36 : vector<8x8xf32>
    %38 = math.exp %37 : vector<8x8xf32>
    %cst_17 = arith.constant dense<0.000000e+00> : vector<8xf32>
    %39 = vector.multi_reduction <add>, %38, %cst_17 [1] : vector<8x8xf32> to vector<8xf32>
    %40 = vector.shape_cast %39 : vector<8xf32> to vector<8x1xf32>
    %41 = tpu.reciprocal %40 {approx = true} : vector<8x1xf32> -> vector<8x1xf32>
    %42 = vector.broadcast %41 : vector<8x1xf32> to vector<8x8xf32>
    %43 = arith.mulf %38, %42 : vector<8x8xf32>
    %44 = arith.truncf %43 : vector<8x8xf32> to vector<8x8xbf16>
    %cst_18 = arith.constant dense<0.000000e+00> : vector<8x8xf32>
    %45 = tpu.matmul %44, %32, %cst_18 {dimension_numbers = #tpu.dot_dimension_numbers<[1], [0], [0], [1], [0, 0, 1, 1], [], []>} : vector<8x8xbf16>, vector<8x8xbf16>, vector<8x8xf32> -> vector<8x8xf32>
    %46 = vector.extract_strided_slice %11 {offsets = [0, 16], sizes = [8, 8], strides = [1, 1]} : vector<8x32xbf16> to vector<8x8xbf16>
    %47 = vector.extract_strided_slice %12 {offsets = [0, 16], sizes = [8, 8], strides = [1, 1]} : vector<8x32xbf16> to vector<8x8xbf16>
    %48 = vector.extract_strided_slice %13 {offsets = [0, 16], sizes = [8, 8], strides = [1, 1]} : vector<8x32xbf16> to vector<8x8xbf16>
    %cst_19 = arith.constant dense<0.000000e+00> : vector<8x8xf32>
    %49 = tpu.matmul %46, %47, %cst_19 {dimension_numbers = #tpu.dot_dimension_numbers<[1], [1], [0], [0], [0, 0, 1, 0], [], []>} : vector<8x8xbf16>, vector<8x8xbf16>, vector<8x8xf32> -> vector<8x8xf32>
    %cst_20 = arith.constant dense<0xFF800000> : vector<8xf32>
    %50 = vector.multi_reduction <maximumf>, %49, %cst_20 [1] : vector<8x8xf32> to vector<8xf32>
    %51 = vector.shape_cast %50 : vector<8xf32> to vector<8x1xf32>
    %52 = vector.broadcast %51 : vector<8x1xf32> to vector<8x8xf32>
    %53 = arith.subf %49, %52 : vector<8x8xf32>
    %54 = math.exp %53 : vector<8x8xf32>
    %cst_21 = arith.constant dense<0.000000e+00> : vector<8xf32>
    %55 = vector.multi_reduction <add>, %54, %cst_21 [1] : vector<8x8xf32> to vector<8xf32>
    %56 = vector.shape_cast %55 : vector<8xf32> to vector<8x1xf32>
    %57 = tpu.reciprocal %56 {approx = true} : vector<8x1xf32> -> vector<8x1xf32>
    %58 = vector.broadcast %57 : vector<8x1xf32> to vector<8x8xf32>
    %59 = arith.mulf %54, %58 : vector<8x8xf32>
    %60 = arith.truncf %59 : vector<8x8xf32> to vector<8x8xbf16>
    %cst_22 = arith.constant dense<0.000000e+00> : vector<8x8xf32>
    %61 = tpu.matmul %60, %48, %cst_22 {dimension_numbers = #tpu.dot_dimension_numbers<[1], [0], [0], [1], [0, 0, 1, 1], [], []>} : vector<8x8xbf16>, vector<8x8xbf16>, vector<8x8xf32> -> vector<8x8xf32>
    %62 = vector.extract_strided_slice %11 {offsets = [0, 24], sizes = [8, 8], strides = [1, 1]} : vector<8x32xbf16> to vector<8x8xbf16>
    %63 = vector.extract_strided_slice %12 {offsets = [0, 24], sizes = [8, 8], strides = [1, 1]} : vector<8x32xbf16> to vector<8x8xbf16>
    %64 = vector.extract_strided_slice %13 {offsets = [0, 24], sizes = [8, 8], strides = [1, 1]} : vector<8x32xbf16> to vector<8x8xbf16>
    %cst_23 = arith.constant dense<0.000000e+00> : vector<8x8xf32>
    %65 = tpu.matmul %62, %63, %cst_23 {dimension_numbers = #tpu.dot_dimension_numbers<[1], [1], [0], [0], [0, 0, 1, 0], [], []>} : vector<8x8xbf16>, vector<8x8xbf16>, vector<8x8xf32> -> vector<8x8xf32>
    %cst_24 = arith.constant dense<0xFF800000> : vector<8xf32>
    %66 = vector.multi_reduction <maximumf>, %65, %cst_24 [1] : vector<8x8xf32> to vector<8xf32>
    %67 = vector.shape_cast %66 : vector<8xf32> to vector<8x1xf32>
    %68 = vector.broadcast %67 : vector<8x1xf32> to vector<8x8xf32>
    %69 = arith.subf %65, %68 : vector<8x8xf32>
    %70 = math.exp %69 : vector<8x8xf32>
    %cst_25 = arith.constant dense<0.000000e+00> : vector<8xf32>
    %71 = vector.multi_reduction <add>, %70, %cst_25 [1] : vector<8x8xf32> to vector<8xf32>
    %72 = vector.shape_cast %71 : vector<8xf32> to vector<8x1xf32>
    %73 = tpu.reciprocal %72 {approx = true} : vector<8x1xf32> -> vector<8x1xf32>
    %74 = vector.broadcast %73 : vector<8x1xf32> to vector<8x8xf32>
    %75 = arith.mulf %70, %74 : vector<8x8xf32>
    %76 = arith.truncf %75 : vector<8x8xf32> to vector<8x8xbf16>
    %cst_26 = arith.constant dense<0.000000e+00> : vector<8x8xf32>
    %77 = tpu.matmul %76, %64, %cst_26 {dimension_numbers = #tpu.dot_dimension_numbers<[1], [0], [0], [1], [0, 0, 1, 1], [], []>} : vector<8x8xbf16>, vector<8x8xbf16>, vector<8x8xf32> -> vector<8x8xf32>
    %78 = tpu.concatenate %29, %45, %61, %77 in 1 : vector<8x8xf32>, vector<8x8xf32>, vector<8x8xf32>, vector<8x8xf32> -> vector<8x32xf32>
    %c0_27 = arith.constant 0 : index
    %c0_28 = arith.constant 0 : index
    %c0_29 = arith.constant 0 : index
    %79 = vector.load %arg6[%c0_27, %c0_28, %c0_29] : memref<1x8x32xf32, #tpu.memory_space<vmem>>, vector<1x8x32xf32>
    %80 = vector.shape_cast %79 : vector<1x8x32xf32> to vector<8x32xf32>
    %81 = vector.shape_cast %78 : vector<8x32xf32> to vector<1x8x32xf32>
    tpu.vector_store %arg6[%c0_27, %c0_28, %c0_29], %81 {strides = array<i32>} : memref<1x8x32xf32, #tpu.memory_space<vmem>>, vector<1x8x32xf32>,
    return
  }
  func.func @transform_0(%arg0: i32, %arg1: i32) -> (i32, i32, i32) {
    %c0_i32 = arith.constant 0 : i32
    %c0_i32_0 = arith.constant 0 : i32
    return %arg0, %arg1, %c0_i32 : i32, i32, i32
  }
  func.func @transform_1(%arg0: i32, %arg1: i32) -> (i32, i32, i32) {
    %c0_i32 = arith.constant 0 : i32
    %c0_i32_0 = arith.constant 0 : i32
    %c0_i32_1 = arith.constant 0 : i32
    return %arg0, %c0_i32, %c0_i32_0 : i32, i32, i32
  }
  func.func @transform_2(%arg0: i32, %arg1: i32) -> (i32, i32, i32) {
    %c0_i32 = arith.constant 0 : i32
    %c0_i32_0 = arith.constant 0 : i32
    %c0_i32_1 = arith.constant 0 : i32
    return %arg0, %c0_i32, %c0_i32_0 : i32, i32, i32
  }
  func.func @transform_3(%arg0: i32, %arg1: i32) -> (i32, i32, i32) {
    %c0_i32 = arith.constant 0 : i32
    %c0_i32_0 = arith.constant 0 : i32
    %c0_i32_1 = arith.constant 0 : i32
    %c0_i32_2 = arith.constant 0 : i32
    return %c0_i32, %c0_i32_0, %c0_i32_1 : i32, i32, i32
  }
  func.func @transform_4(%arg0: i32, %arg1: i32) -> (i32, i32, i32) {
    %c0_i32 = arith.constant 0 : i32
    %c0_i32_0 = arith.constant 0 : i32
    return %arg0, %arg1, %c0_i32 : i32, i32, i32
  }
}

</mosaic_0001>

<llo_original>
// kernel: tpu_custom_call.1
$region0: #{tpu_custom_call.1}
  #allocation0 [shape = 'u32[]', space=smem, size = 0x4, offset = 0x4, fixed_abs, tag = 'smem constant byte address 0x4 - core index']
  #allocation1 [shape = 'u32[144,128]{1,0:T(1,128)}', space=vmem, size = 0x12000, scoped, tag = 'internal scratch']
  #allocation2 [shape = 'bf16[8,32]{1,0:T(8,128)(2,1)}', space=vmem, size = 0x800, scoped, tag = 'scratch operand']
  #allocation3 [shape = 'bf16[8,32]{1,0:T(8,128)(2,1)}', space=vmem, size = 0x800, scoped, tag = 'scratch operand']
  %s0 = inlined_call_operand.hbm [shape: f32[2,8,32], index: 0, kind: input, shape index: {}]
  %s1 = inlined_call_operand.hbm [shape: f32[2,8,32], index: 1, kind: input, shape index: {}]
  %s2 = inlined_call_operand.hbm [shape: f32[2,8,32], index: 2, kind: input, shape index: {}]
  %s3 = inlined_call_operand.hbm [shape: bf16[3,32,32], index: 3, kind: input, shape index: {}]
  %s4 = inlined_call_operand.hbm [shape: f32[2,8,32], index: 4, kind: output, shape index: {}]
  %s5 = sld [smem:[#allocation0]]
  $region69: #{tpu_custom_call.1} parent=0
    _
  %s7 = ssub.s32 1, %s5
  %s8 = scalar_select 0, %s7, %s5
  $region1: #{tpu_custom_call.1} parent=0
    #allocation4 [shape = 'u8[8192]{0}', space=vmem, size = 0x2000, scoped, tag = 'input window, operand 0']
    #allocation5 [shape = 's32[2]{0}', space=sflag, size = 0x8, scoped, tag = 'scoped memory for tpu_custom_call.1']
    #allocation6 [shape = 's32[2]{0}', space=sflag, size = 0x8, scoped, tag = 'scoped memory for tpu_custom_call.1']
    #allocation7 [shape = 'u8[8192]{0}', space=vmem, size = 0x2000, scoped, tag = 'input window, operand 1']
    #allocation8 [shape = 's32[2]{0}', space=sflag, size = 0x8, scoped, tag = 'scoped memory for tpu_custom_call.1']
    #allocation9 [shape = 'u8[8192]{0}', space=vmem, size = 0x2000, scoped, tag = 'input window, operand 2']
    #allocation10 [shape = 'u8[24576]{0}', space=vmem, size = 0x6000, scoped, tag = 'input window, operand 3, single buffered']
    #allocation11 [shape = 's32[1]{0}', space=sflag, size = 0x4, scoped, tag = 'scoped memory for tpu_custom_call.1']
    #allocation12 [shape = 'u8[8192]{0}', space=vmem, size = 0x2000, scoped, tag = 'output window, operand 0']
    %9 = vsyncpa [#allocation5], 0
    %s10 = scalar_lea.sflag [#allocation5], 1
    %11 = vsyncpa %s10, 0
    %12 = vsyncpa [#allocation8], 0
    %s13 = scalar_lea.sflag [#allocation8], 1
    %14 = vsyncpa %s13, 0
    %15 = vsyncpa [#allocation11], 0
    %16 = vsyncpa [#allocation6], 0
    %s17 = scalar_lea.sflag [#allocation6], 1
    %18 = vsyncpa %s17, 0
    loop: start=0, step=1, limit=4
    $region2: #{tpu_custom_call.1} parent=1 // loop_pre_header
      _
    $region3: #{tpu_custom_call.1} parent=1 // loop_header
      %s20 = sphi 0, %s24
      %p21 = scmp.ge.s32.totalorder %s20, 4
      %s27 = sphi 0, %s39
      %s28 = sphi 0, %s35
      %s29 = sphi 0, %s27
      %s30 = sphi 0, %s28
      %s31 = sphi 0, %s29
      %s32 = sphi 0, %s30
      %s44 = sphi 0, %s46
      %s47 = sphi 0, %s44
      %s48 = sphi 0, %s47
      %s64 = sphi 0, %s48
      %s70 = sphi 0, %s72
      %s73 = sphi 0, %s70
      %s74 = sphi 0, %s73
      %s90 = sphi 0, %s74
      %s96 = sphi 0, %s98
      %s99 = sphi 0, %s96
      %s100 = sphi 0, %s99
      %s116 = sphi 0, %s100
      %s120 = sphi 0, %s120
      %s122 = sphi 0, %s120
      %s123 = sphi 0, %s122
      %s137 = sphi 0, %s123
      %s145 = sphi 0, %s147
      %s148 = sphi 0, %s145
      %s149 = sphi 0, %s148
      %s165 = sphi 0, %s149
    $region4: #{tpu_custom_call.1} parent=1 // loop_header_branch
      %23 = sbr.rel (%p21) target = $region8
    $region5: #{tpu_custom_call.1} parent=1 // loop_body
      %s25 = ssub.s32 %s20, 1
      %s26 = ssub.s32 %s20, 2
      %s33 = sadd.s32 1, %s28
      %p34 = scmp.ge.s32.totalorder %s33, 1
      %s35 = scalar_select %p34, 0, %s33
      %s36 = sadd.s32 1, %s27
      %s37 = scalar_select %p34, %s36, %s27
      %p38 = scmp.ge.s32.totalorder %s37, 2
      %s39 = scalar_select %p38, 0, %s37
      %s40 = ssub.s32 %s27, %s39
      %s41 = ssub.s32 %s28, %s35
      %s42 = sor.u32 %s40, %s41
      %p43 = scmp.eq.s32.totalorder %s42, 0
      %s45 = sadd.s32 %s44, 1
      %s46 = scalar_select %p43, %s44, %s45
      %p49 = pneg %p43
      %p50 = scmp.eq.s32.totalorder %s20, 1
      %p51 = por %p49, %p50
      %p52 = scmp.ne.s32.totalorder %s44, %s47
      %p53 = scmp.eq.s32.totalorder %s20, 0
      %p54 = por %p52, %p53
      %p55 = scmp.ne.s32.totalorder %s44, %s47
      %p56 = scmp.eq.s32.totalorder %s25, 1
      %p57 = por %p55, %p56
      %p58 = scmp.ne.s32.totalorder %s47, %s48
      %p59 = scmp.eq.s32.totalorder %s25, 0
      %p60 = por %p58, %p59
      %p61 = scmp.ne.s32.totalorder %s47, %s48
      %p62 = scmp.eq.s32.totalorder %s26, 1
      %p63 = por %p61, %p62
      %p65 = scmp.ne.s32.totalorder %s48, %s64
      %p66 = scmp.eq.s32.totalorder %s26, 0
      %p67 = por %p65, %p66
      %s68 = ssub.s32 %s27, %s39
      %p69 = scmp.eq.s32.totalorder %s68, 0
      %s71 = sadd.s32 %s70, 1
      %s72 = scalar_select %p69, %s70, %s71
      %p75 = pneg %p69
      %p76 = scmp.eq.s32.totalorder %s20, 1
      %p77 = por %p75, %p76
      %p78 = scmp.ne.s32.totalorder %s70, %s73
      %p79 = scmp.eq.s32.totalorder %s20, 0
      %p80 = por %p78, %p79
      %p81 = scmp.ne.s32.totalorder %s70, %s73
      %p82 = scmp.eq.s32.totalorder %s25, 1
      %p83 = por %p81, %p82
      %p84 = scmp.ne.s32.totalorder %s73, %s74
      %p85 = scmp.eq.s32.totalorder %s25, 0
      %p86 = por %p84, %p85
      %p87 = scmp.ne.s32.totalorder %s73, %s74
      %p88 = scmp.eq.s32.totalorder %s26, 1
      %p89 = por %p87, %p88
      %p91 = scmp.ne.s32.totalorder %s74, %s90
      %p92 = scmp.eq.s32.totalorder %s26, 0
      %p93 = por %p91, %p92
      %s94 = ssub.s32 %s27, %s39
      %p95 = scmp.eq.s32.totalorder %s94, 0
      %s97 = sadd.s32 %s96, 1
      %s98 = scalar_select %p95, %s96, %s97
      %p101 = pneg %p95
      %p102 = scmp.eq.s32.totalorder %s20, 1
      %p103 = por %p101, %p102
      %p104 = scmp.ne.s32.totalorder %s96, %s99
      %p105 = scmp.eq.s32.totalorder %s20, 0
      %p106 = por %p104, %p105
      %p107 = scmp.ne.s32.totalorder %s96, %s99
      %p108 = scmp.eq.s32.totalorder %s25, 1
      %p109 = por %p107, %p108
      %p110 = scmp.ne.s32.totalorder %s99, %s100
      %p111 = scmp.eq.s32.totalorder %s25, 0
      %p112 = por %p110, %p111
      %p113 = scmp.ne.s32.totalorder %s99, %s100
      %p114 = scmp.eq.s32.totalorder %s26, 1
      %p115 = por %p113, %p114
      %p117 = scmp.ne.s32.totalorder %s100, %s116
      %p118 = scmp.eq.s32.totalorder %s26, 0
      %p119 = por %p117, %p118
      %s121 = sadd.s32 %s120, 1
      %p124 = scmp.eq.s32.totalorder %s20, 1
      %p125 = scmp.ne.s32.totalorder %s120, %s122
      %p126 = scmp.eq.s32.totalorder %s20, 0
      %p127 = por %p125, %p126
      %p128 = scmp.ne.s32.totalorder %s120, %s122
      %p129 = scmp.eq.s32.totalorder %s25, 1
      %p130 = por %p128, %p129
      %p131 = scmp.ne.s32.totalorder %s122, %s123
      %p132 = scmp.eq.s32.totalorder %s25, 0
      %p133 = por %p131, %p132
      %p134 = scmp.ne.s32.totalorder %s122, %s123
      %p135 = scmp.eq.s32.totalorder %s26, 1
      %p136 = por %p134, %p135
      %p138 = scmp.ne.s32.totalorder %s123, %s137
      %p139 = scmp.eq.s32.totalorder %s26, 0
      %p140 = por %p138, %p139
      %s141 = ssub.s32 %s27, %s39
      %s142 = ssub.s32 %s28, %s35
      %s143 = sor.u32 %s141, %s142
      %p144 = scmp.eq.s32.totalorder %s143, 0
      %s146 = sadd.s32 %s145, 1
      %s147 = scalar_select %p144, %s145, %s146
      %p150 = pneg %p144
      %p151 = scmp.eq.s32.totalorder %s20, 1
      %p152 = por %p150, %p151
      %p153 = scmp.ne.s32.totalorder %s145, %s148
      %p154 = scmp.eq.s32.totalorder %s20, 0
      %p155 = por %p153, %p154
      %p156 = scmp.ne.s32.totalorder %s145, %s148
      %p157 = scmp.eq.s32.totalorder %s25, 1
      %p158 = por %p156, %p157
      %p159 = scmp.ne.s32.totalorder %s148, %s149
      %p160 = scmp.eq.s32.totalorder %s25, 0
      %p161 = por %p159, %p160
      %p162 = scmp.ne.s32.totalorder %s148, %s149
      %p163 = scmp.eq.s32.totalorder %s26, 1
      %p164 = por %p162, %p163
      %p166 = scmp.ne.s32.totalorder %s149, %s165
      %p167 = scmp.eq.s32.totalorder %s26, 0
      %p168 = por %p166, %p167
      %p169 = scmp.le.s32.totalorder 1, %s20
      %p170 = scmp.lt.s32.totalorder %s20, 3
      %p171 = pnand %p169, %p170
      %p172 = pneg %p171
      // Predicated region
      $region9: #{tpu_custom_call.1} parent=5 // pred_check
        _
      $region10: #{tpu_custom_call.1} parent=5 // pred_check_branch
        %174 = sbr.rel (%p171) target = $region12
      $region11: #{tpu_custom_call.1} parent=5 // pred_region
        %s175 = ssub.s32 %s20, 1
        // Predicated region
        $region13: #{tpu_custom_call.1} parent=11 // pred_check
          %p176 = pneg %p133
        $region14: #{tpu_custom_call.1} parent=11 // pred_check_branch
          %178 = sbr.rel (%p176) target = $region16
        $region15: #{tpu_custom_call.1} parent=11 // pred_region
          %s180 = ssub.s32 768, 768
          %181 = vsyncadd [#allocation11], %s180
          %s182 = sshll.u32 [#allocation10], 4
          %s183 = int_to_ptr.vmem [resolvable:$true] %s182
          %188 = dma.hbm_to_vmem [thread:$0]  %s3, 768, %s183, [#allocation11], 64, 64, 4
        $region16: #{tpu_custom_call.1} parent=11 // pred_fallthru
          _
      $region12: #{tpu_custom_call.1} parent=5 // pred_fallthru
        _
      %p189 = scmp.lt.s32.totalorder %s20, 2
      // Predicated region
      $region17: #{tpu_custom_call.1} parent=5 // pred_check
        %p190 = pneg %p189
      $region18: #{tpu_custom_call.1} parent=5 // pred_check_branch
        %192 = sbr.rel (%p190) target = $region20
      $region19: #{tpu_custom_call.1} parent=5 // pred_region
        // Predicated region
        $region21: #{tpu_custom_call.1} parent=19 // pred_check
          %p193 = pneg %p54
        $region22: #{tpu_custom_call.1} parent=19 // pred_check_branch
          %195 = sbr.rel (%p193) target = $region24
        $region23: #{tpu_custom_call.1} parent=19 // pred_region
          %s196 = sand.u32 %s44, 1
          %s197 = scalar_lea.sflag [#allocation5], %s196
          %s198 = sand.u32 %s44, 1
          %s199 = smul.addr %s198, 8
          %s200 = scalar_lea.vmem [#allocation4], %s199
          %s202 = ssub.s32 128, 128
          %203 = vsyncadd %s197, %s202
          %s204 = sadd.s32 %s28, %s27
          %s205 = smul.addr %s204, 128
          %s206 = scalar_lea.hbm %s0, %s205
          %s208 = sshll.u32 %s200, 4
          %s209 = int_to_ptr.vmem [resolvable:$true] %s208
          %211 = dma.hbm_to_vmem [thread:$0]  %s206, 128, %s209, %s197
        $region24: #{tpu_custom_call.1} parent=19 // pred_fallthru
          _
        // Predicated region
        $region25: #{tpu_custom_call.1} parent=19 // pred_check
          %p212 = pneg %p80
        $region26: #{tpu_custom_call.1} parent=19 // pred_check_branch
          %214 = sbr.rel (%p212) target = $region28
        $region27: #{tpu_custom_call.1} parent=19 // pred_region
          %s215 = sand.u32 %s20, 1
          %s216 = scalar_lea.sflag [#allocation8], %s215
          %s217 = sand.u32 %s70, 1
          %s218 = smul.addr %s217, 8
          %s219 = scalar_lea.vmem [#allocation7], %s218
          %s221 = ssub.s32 128, 128
          %222 = vsyncadd %s216, %s221
          %s223 = smul.addr %s27, 128
          %s224 = scalar_lea.hbm %s1, %s223
          %s226 = sshll.u32 %s219, 4
          %s227 = int_to_ptr.vmem [resolvable:$true] %s226
          %229 = dma.hbm_to_vmem [thread:$0]  %s224, 128, %s227, %s216
        $region28: #{tpu_custom_call.1} parent=19 // pred_fallthru
          _
        // Predicated region
        $region29: #{tpu_custom_call.1} parent=19 // pred_check
          %p230 = pneg %p106
        $region30: #{tpu_custom_call.1} parent=19 // pred_check_branch
          %232 = sbr.rel (%p230) target = $region32
        $region31: #{tpu_custom_call.1} parent=19 // pred_region
          %s233 = sand.u32 %s20, 1
          %s234 = scalar_lea.sflag [#allocation8], %s233
          %s235 = sand.u32 %s96, 1
          %s236 = smul.addr %s235, 8
          %s237 = scalar_lea.vmem [#allocation9], %s236
          %s239 = ssub.s32 128, 128
          %240 = vsyncadd %s234, %s239
          %s241 = smul.addr %s27, 128
          %s242 = scalar_lea.hbm %s2, %s241
          %s244 = sshll.u32 %s237, 4
          %s245 = int_to_ptr.vmem [resolvable:$true] %s244
          %247 = dma.hbm_to_vmem [thread:$0]  %s242, 128, %s245, %s234
        $region32: #{tpu_custom_call.1} parent=19 // pred_fallthru
          _
      $region20: #{tpu_custom_call.1} parent=5 // pred_fallthru
        _
      %p248 = scmp.le.s32.totalorder 1, %s20
      %p249 = scmp.lt.s32.totalorder %s20, 3
      %p250 = pnand %p248, %p249
      %p251 = pneg %p250
      // Predicated region
      $region33: #{tpu_custom_call.1} parent=5 // pred_check
        _
      $region34: #{tpu_custom_call.1} parent=5 // pred_check_branch
        %253 = sbr.rel (%p250) target = $region36
      $region35: #{tpu_custom_call.1} parent=5 // pred_region
        %s254 = ssub.s32 %s20, 1
        %s255 = sand.u32 %s47, 1
        %s256 = scalar_lea.sflag [#allocation5], %s255
        %s257 = sand.u32 %s47, 1
        %s258 = smul.addr %s257, 8
        %s259 = scalar_lea.vmem [#allocation4], %s258
        // Predicated region
        $region37: #{tpu_custom_call.1} parent=35 // pred_check
          %p260 = pneg %p60
        $region38: #{tpu_custom_call.1} parent=35 // pred_check_branch
          %262 = sbr.rel (%p260) target = $region40
        $region39: #{tpu_custom_call.1} parent=35 // pred_region
          %263 = dma.done %s256, 128
        $region40: #{tpu_custom_call.1} parent=35 // pred_fallthru
          _
        %s264 = sand.u32 %s25, 1
        %s265 = scalar_lea.sflag [#allocation8], %s264
        %s266 = sand.u32 %s73, 1
        %s267 = smul.addr %s266, 8
        %s268 = scalar_lea.vmem [#allocation7], %s267
        // Predicated region
        $region41: #{tpu_custom_call.1} parent=35 // pred_check
          %p269 = pneg %p86
        $region42: #{tpu_custom_call.1} parent=35 // pred_check_branch
          %271 = sbr.rel (%p269) target = $region44
        $region43: #{tpu_custom_call.1} parent=35 // pred_region
          %272 = dma.done %s265, 128
        $region44: #{tpu_custom_call.1} parent=35 // pred_fallthru
          _
        %s273 = sand.u32 %s25, 1
        %s274 = scalar_lea.sflag [#allocation8], %s273
        %s275 = sand.u32 %s99, 1
        %s276 = smul.addr %s275, 8
        %s277 = scalar_lea.vmem [#allocation9], %s276
        // Predicated region
        $region45: #{tpu_custom_call.1} parent=35 // pred_check
          %p278 = pneg %p112
        $region46: #{tpu_custom_call.1} parent=35 // pred_check_branch
          %280 = sbr.rel (%p278) target = $region48
        $region47: #{tpu_custom_call.1} parent=35 // pred_region
          %281 = dma.done %s274, 128
        $region48: #{tpu_custom_call.1} parent=35 // pred_fallthru
          _
        // Predicated region
        $region49: #{tpu_custom_call.1} parent=35 // pred_check
          %p282 = pneg %p133
        $region50: #{tpu_custom_call.1} parent=35 // pred_check_branch
          %284 = sbr.rel (%p282) target = $region52
        $region51: #{tpu_custom_call.1} parent=35 // pred_region
          %285 = dma.done [#allocation11], 768
        $region52: #{tpu_custom_call.1} parent=35 // pred_fallthru
          _
        %s286 = sand.u32 %s47, 1
        %s287 = scalar_lea.sflag [#allocation5], %s286
        %s288 = sand.u32 %s47, 1
        %s289 = smul.addr %s288, 8
        %s290 = scalar_lea.vmem [#allocation4], %s289
        %p291 = pneg %p60
        %p292 = pneg %p57
        %s293 = sand.u32 %s25, 1
        %s294 = scalar_lea.sflag [#allocation8], %s293
        %s295 = sand.u32 %s73, 1
        %s296 = smul.addr %s295, 8
        %s297 = scalar_lea.vmem [#allocation7], %s296
        %p298 = pneg %p86
        %p299 = pneg %p83
        %s300 = sand.u32 %s25, 1
        %s301 = scalar_lea.sflag [#allocation8], %s300
        %s302 = sand.u32 %s99, 1
        %s303 = smul.addr %s302, 8
        %s304 = scalar_lea.vmem [#allocation9], %s303
        %p305 = pneg %p112
        %p306 = pneg %p109
        %p307 = pneg %p133
        %p308 = pneg %p130
        %p309 = pneg %p161
        %p310 = pneg %p158
        %s311 = sand.u32 %s148, 1
        %s312 = scalar_lea.sflag [#allocation6], %s311
        %s313 = sand.u32 %s148, 1
        %s314 = smul.addr %s313, 8
        %s315 = scalar_lea.vmem [#allocation12], %s314
        %p317 = scmp.eq.s32.totalorder %s30, 0
        // Predicated region
        $region53: #{tpu_custom_call.1} parent=35 // pred_check
          %p318 = pneg %p317
        $region54: #{tpu_custom_call.1} parent=35 // pred_check_branch
          %320 = sbr.rel (%p318) target = $region56
        $region55: #{tpu_custom_call.1} parent=35 // pred_region
          %v321 = vld [vmem:[%s268] sm:$0xff]
          %v322 = vpack.c.bf16 %v321, %v321
          %v323 = vld [vmem:[%s277] sm:$0xff]
          %v324 = vpack.c.bf16 %v323, %v323
          %s325 = scalar_lea.vmem [#allocation10], 16
          %v326 = vld [vmem:[%s325] sm:$0xf]
          %v327 = vld [vmem:[%s325 + $0x4] sm:$0xf]
          %v328 = vld [vmem:[%s325 + $0x8] sm:$0xf]
          %v329 = vld [vmem:[%s325 + $0xc] sm:$0xf]
          %v334 = vunpack.c.l.b16 %v326
          %v335 = vunpack.c.l.b16 %v327
          %v336 = vunpack.c.l.b16 %v328
          %v337 = vunpack.c.l.b16 %v329
          %v338 = vpack.c.b16 %v335, %v334
          %v339 = vpack.c.b16 %v337, %v336
          %vm342 = vcmask 261120
          %v344 = vsel %vm342, %v322, 0
          %346 = vmatprep.subr.bf16.mxu0 0
          %347 = vmatpush1.bf16.msra.mxu0 %v338
          %348 = vmatprep.subr.bf16.mxu0 0
          %349 = vmatpush1.bf16.msra.mxu0 %v339
          %350 = vmatprep.subr.bf16.mxu0 0
          %351 = vmatpush1.bf16.msra.mxu0 0
          %352 = vmatprep.subr.bf16.mxu0 0
          %353 = vmatpush1.bf16.msra.mxu0 0
          %354 = vmatprep.subr.bf16.mxu0 0
          %355 = vmatpush1.bf16.msra.mxu0 0
          %356 = vmatprep.subr.bf16.mxu0 0
          %357 = vmatpush1.bf16.msra.mxu0 0
          %358 = vmatprep.subr.bf16.mxu0 0
          %359 = vmatpush1.bf16.msra.mxu0 0
          %360 = vmatprep.subr.bf16.mxu0 0
          %361 = vmatpush1.bf16.msra.mxu0 0
          %362 = vmatprep.subr.bf16.mxu0 0
          %363 = vmatpush1.bf16.msra.mxu0 0
          %364 = vmatprep.subr.bf16.mxu0 0
          %365 = vmatpush1.bf16.msra.mxu0 0
          %366 = vmatprep.subr.bf16.mxu0 0
          %367 = vmatpush1.bf16.msra.mxu0 0
          %368 = vmatprep.subr.bf16.mxu0 0
          %369 = vmatpush1.bf16.msra.mxu0 0
          %370 = vmatprep.subr.bf16.mxu0 0
          %371 = vmatpush1.bf16.msra.mxu0 0
          %372 = vmatprep.subr.bf16.mxu0 0
          %373 = vmatpush1.bf16.msra.mxu0 0
          %374 = vmatprep.subr.bf16.mxu0 0
          %375 = vmatpush1.bf16.msra.mxu0 0
          %376 = vmatprep.subr.bf16.mxu0 0
          %377 = vmatpush1.bf16.msra.mxu0 0
          %378 = vmatprep.mubr.bf16.mxu0 0
          %379 = vmatmul.mubr.bf16.gmra.mrb[0].mxu0 %v344
          %v380 = vpop.f32.mrb[0].mxu0
          %v381 = vadd.f32 0.0, %v380
          %v382 = vpop.f32.mrb[0].mxu0
          %v383 = vpop.f32.mrb[0].mxu0
          %v384 = vpop.f32.mrb[0].mxu0
          %385 = vdwg.mxu0
          %v386 = vpack.c.bf16 %v381, %v381
          %vm387 = vcmask 257024
          %388 = vst.msk [vmem:[#allocation2] sm:$0xf] %vm387, %v386
          %s389 = scalar_lea.vmem [#allocation10], 32
          %v390 = vld [vmem:[%s389] sm:$0xf]
          %v391 = vld [vmem:[%s389 + $0x4] sm:$0xf]
          %v392 = vld [vmem:[%s389 + $0x8] sm:$0xf]
          %v393 = vld [vmem:[%s389 + $0xc] sm:$0xf]
          %v398 = vunpack.c.l.b16 %v390
          %v399 = vunpack.c.l.b16 %v391
          %v400 = vunpack.c.l.b16 %v392
          %v401 = vunpack.c.l.b16 %v393
          %v402 = vpack.c.b16 %v399, %v398
          %v403 = vpack.c.b16 %v401, %v400
          %v407 = vsel %vm342, %v324, 0
          %409 = vmatprep.subr.bf16.mxu0 0
          %410 = vmatpush1.bf16.msra.mxu0 %v402
          %411 = vmatprep.subr.bf16.mxu0 0
          %412 = vmatpush1.bf16.msra.mxu0 %v403
          %413 = vmatprep.subr.bf16.mxu0 0
          %414 = vmatpush1.bf16.msra.mxu0 0
          %415 = vmatprep.subr.bf16.mxu0 0
          %416 = vmatpush1.bf16.msra.mxu0 0
          %417 = vmatprep.subr.bf16.mxu0 0
          %418 = vmatpush1.bf16.msra.mxu0 0
          %419 = vmatprep.subr.bf16.mxu0 0
          %420 = vmatpush1.bf16.msra.mxu0 0
          %421 = vmatprep.subr.bf16.mxu0 0
          %422 = vmatpush1.bf16.msra.mxu0 0
          %423 = vmatprep.subr.bf16.mxu0 0
          %424 = vmatpush1.bf16.msra.mxu0 0
          %425 = vmatprep.subr.bf16.mxu0 0
          %426 = vmatpush1.bf16.msra.mxu0 0
          %427 = vmatprep.subr.bf16.mxu0 0
          %428 = vmatpush1.bf16.msra.mxu0 0
          %429 = vmatprep.subr.bf16.mxu0 0
          %430 = vmatpush1.bf16.msra.mxu0 0
          %431 = vmatprep.subr.bf16.mxu0 0
          %432 = vmatpush1.bf16.msra.mxu0 0
          %433 = vmatprep.subr.bf16.mxu0 0
          %434 = vmatpush1.bf16.msra.mxu0 0
          %435 = vmatprep.subr.bf16.mxu0 0
          %436 = vmatpush1.bf16.msra.mxu0 0
          %437 = vmatprep.subr.bf16.mxu0 0
          %438 = vmatpush1.bf16.msra.mxu0 0
          %439 = vmatprep.subr.bf16.mxu0 0
          %440 = vmatpush1.bf16.msra.mxu0 0
          %441 = vmatprep.mubr.bf16.mxu0 0
          %442 = vmatmul.mubr.bf16.gmra.mrb[0].mxu0 %v407
          %v443 = vpop.f32.mrb[0].mxu0
          %v444 = vadd.f32 0.0, %v443
          %v445 = vpop.f32.mrb[0].mxu0
          %v446 = vpop.f32.mrb[0].mxu0
          %v447 = vpop.f32.mrb[0].mxu0
          %448 = vdwg.mxu0
          %v449 = vpack.c.bf16 %v444, %v444
          %450 = vst.msk [vmem:[#allocation3] sm:$0xf] %vm387, %v449
        $region56: #{tpu_custom_call.1} parent=35 // pred_fallthru
          _
        %v451 = vld [vmem:[%s259] sm:$0xff]
        %v452 = vpack.c.bf16 %v451, %v451
        %v453 = vld [vmem:[#allocation10] sm:$0xf]
        %v454 = vld [vmem:[#allocation10 + $0x4] sm:$0xf]
        %v455 = vld [vmem:[#allocation10 + $0x8] sm:$0xf]
        %v456 = vld [vmem:[#allocation10 + $0xc] sm:$0xf]
        %v461 = vunpack.c.l.b16 %v453
        %v462 = vunpack.c.l.b16 %v454
        %v463 = vunpack.c.l.b16 %v455
        %v464 = vunpack.c.l.b16 %v456
        %v465 = vpack.c.b16 %v462, %v461
        %v466 = vpack.c.b16 %v464, %v463
        %vm469 = vcmask 261120
        %v471 = vsel %vm469, %v452, 0
        %473 = vmatprep.subr.bf16.mxu0 0
        %474 = vmatpush1.bf16.msra.mxu0 %v465
        %475 = vmatprep.subr.bf16.mxu0 0
        %476 = vmatpush1.bf16.msra.mxu0 %v466
        %477 = vmatprep.subr.bf16.mxu0 0
        %478 = vmatpush1.bf16.msra.mxu0 0
        %479 = vmatprep.subr.bf16.mxu0 0
        %480 = vmatpush1.bf16.msra.mxu0 0
        %481 = vmatprep.subr.bf16.mxu0 0
        %482 = vmatpush1.bf16.msra.mxu0 0
        %483 = vmatprep.subr.bf16.mxu0 0
        %484 = vmatpush1.bf16.msra.mxu0 0
        %485 = vmatprep.subr.bf16.mxu0 0
        %486 = vmatpush1.bf16.msra.mxu0 0
        %487 = vmatprep.subr.bf16.mxu0 0
        %488 = vmatpush1.bf16.msra.mxu0 0
        %489 = vmatprep.subr.bf16.mxu0 0
        %490 = vmatpush1.bf16.msra.mxu0 0
        %491 = vmatprep.subr.bf16.mxu0 0
        %492 = vmatpush1.bf16.msra.mxu0 0
        %493 = vmatprep.subr.bf16.mxu0 0
        %494 = vmatpush1.bf16.msra.mxu0 0
        %495 = vmatprep.subr.bf16.mxu0 0
        %496 = vmatpush1.bf16.msra.mxu0 0
        %497 = vmatprep.subr.bf16.mxu0 0
        %498 = vmatpush1.bf16.msra.mxu0 0
        %499 = vmatprep.subr.bf16.mxu0 0
        %500 = vmatpush1.bf16.msra.mxu0 0
        %501 = vmatprep.subr.bf16.mxu0 0
        %502 = vmatpush1.bf16.msra.mxu0 0
        %503 = vmatprep.subr.bf16.mxu0 0
        %504 = vmatpush1.bf16.msra.mxu0 0
        %505 = vmatprep.mubr.bf16.mxu0 0
        %506 = vmatmul.mubr.bf16.gmra.mrb[0].mxu0 %v471
        %v507 = vpop.f32.mrb[0].mxu0
        %v508 = vadd.f32 0.0, %v507
        %v509 = vpop.f32.mrb[0].mxu0
        %v510 = vpop.f32.mrb[0].mxu0
        %v511 = vpop.f32.mrb[0].mxu0
        %512 = vdwg.mxu0
        %v513 = vmul.f32 %v508, 0.35355338
        %v514 = vpack.c.bf16 %v513, %v513
        %v515 = vld [vmem:[#allocation2] sm:$0xf]
        %v516 = vld [vmem:[#allocation3] sm:$0xf]
        %vm517 = vcmask 64512
        %v519 = vsel %vm517, %v514, 0
        %v522 = vsel %vm517, %v515, 0
        %524 = vmatprep.subr.bf16.mxu0 0
        %525 = vmatpush1.bf16.xpose.msra.mxu0 %v522
        %526 = vmatprep.subr.bf16.mxu0 0
        %527 = vmatpush1.bf16.xpose.msra.mxu0 0
        %528 = vmatprep.subr.bf16.mxu0 0
        %529 = vmatpush1.bf16.xpose.msra.mxu0 0
        %530 = vmatprep.subr.bf16.mxu0 0
        %531 = vmatpush1.bf16.xpose.msra.mxu0 0
        %532 = vmatprep.subr.bf16.mxu0 0
        %533 = vmatpush1.bf16.xpose.msra.mxu0 0
        %534 = vmatprep.subr.bf16.mxu0 0
        %535 = vmatpush1.bf16.xpose.msra.mxu0 0
        %536 = vmatprep.subr.bf16.mxu0 0
        %537 = vmatpush1.bf16.xpose.msra.mxu0 0
        %538 = vmatprep.subr.bf16.mxu0 0
        %539 = vmatpush1.bf16.xpose.msra.mxu0 0
        %540 = vmatprep.subr.bf16.mxu0 0
        %541 = vmatpush1.bf16.xpose.msra.mxu0 0
        %542 = vmatprep.subr.bf16.mxu0 0
        %543 = vmatpush1.bf16.xpose.msra.mxu0 0
        %544 = vmatprep.subr.bf16.mxu0 0
        %545 = vmatpush1.bf16.xpose.msra.mxu0 0
        %546 = vmatprep.subr.bf16.mxu0 0
        %547 = vmatpush1.bf16.xpose.msra.mxu0 0
        %548 = vmatprep.subr.bf16.mxu0 0
        %549 = vmatpush1.bf16.xpose.msra.mxu0 0
        %550 = vmatprep.subr.bf16.mxu0 0
        %551 = vmatpush1.bf16.xpose.msra.mxu0 0
        %552 = vmatprep.subr.bf16.mxu0 0
        %553 = vmatpush1.bf16.xpose.msra.mxu0 0
        %554 = vmatprep.subr.bf16.mxu0 0
        %555 = vmatpush1.bf16.xpose.msra.mxu0 0
        %556 = vmatprep.mubr.bf16.mxu0 0
        %557 = vmatmul.mubr.bf16.gmra.mrb[0].mxu0 %v519
        %v558 = vpop.f32.mrb[0].mxu0
        %v559 = vadd.f32 0.0, %v558
        %v560 = vpop.f32.mrb[0].mxu0
        %v561 = vpop.f32.mrb[0].mxu0
        %v562 = vpop.f32.mrb[0].mxu0
        %563 = vdwg.mxu0
        %v564 = vsel %vm517, %v559, -inf
        %565 = vmax.xlane.f32.xlu0 %v564
        %v566 = vpop.xlane.xlu0 %565
        %v567 = vsub.f32 %v559, %v566
        %v568 = vmul.f32 %v567, 1.442695
        %v569 = vpow.pop %v568
        %v570 = vsel %vm517, %v569, 0.0
        %571 = vadd.xlane.f32.xlu0 %v570
        %v572 = vpop.xlane.xlu0 %571
        %v573 = vrcp.pop %v572
        %v574 = vmul.f32 %v569, %v573
        %v575 = vpack.c.bf16 %v574, %v574
        %v577 = vsel %vm517, %v575, 0
        %vm579 = vcmask 1043456
        %v581 = vsel %vm579, %v516, 0
        %583 = vmatprep.subr.bf16.mxu0 0
        %584 = vmatpush1.bf16.msra.mxu0 %v581
        %585 = vmatprep.subr.bf16.mxu0 0
        %586 = vmatpush1.bf16.msra.mxu0 0
        %587 = vmatprep.subr.bf16.mxu0 0
        %588 = vmatpush1.bf16.msra.mxu0 0
        %589 = vmatprep.subr.bf16.mxu0 0
        %590 = vmatpush1.bf16.msra.mxu0 0
        %591 = vmatprep.subr.bf16.mxu0 0
        %592 = vmatpush1.bf16.msra.mxu0 0
        %593 = vmatprep.subr.bf16.mxu0 0
        %594 = vmatpush1.bf16.msra.mxu0 0
        %595 = vmatprep.subr.bf16.mxu0 0
        %596 = vmatpush1.bf16.msra.mxu0 0
        %597 = vmatprep.subr.bf16.mxu0 0
        %598 = vmatpush1.bf16.msra.mxu0 0
        %599 = vmatprep.subr.bf16.mxu0 0
        %600 = vmatpush1.bf16.msra.mxu0 0
        %601 = vmatprep.subr.bf16.mxu0 0
        %602 = vmatpush1.bf16.msra.mxu0 0
        %603 = vmatprep.subr.bf16.mxu0 0
        %604 = vmatpush1.bf16.msra.mxu0 0
        %605 = vmatprep.subr.bf16.mxu0 0
        %606 = vmatpush1.bf16.msra.mxu0 0
        %607 = vmatprep.subr.bf16.mxu0 0
        %608 = vmatpush1.bf16.msra.mxu0 0
        %609 = vmatprep.subr.bf16.mxu0 0
        %610 = vmatpush1.bf16.msra.mxu0 0
        %611 = vmatprep.subr.bf16.mxu0 0
        %612 = vmatpush1.bf16.msra.mxu0 0
        %613 = vmatprep.subr.bf16.mxu0 0
        %614 = vmatpush1.bf16.msra.mxu0 0
        %615 = vmatprep.mubr.bf16.mxu0 0
        %616 = vmatmul.mubr.bf16.gmra.mrb[0].mxu0 %v577
        %v617 = vpop.f32.mrb[0].mxu0
        %v618 = vadd.f32 0.0, %v617
        %v619 = vpop.f32.mrb[0].mxu0
        %v620 = vpop.f32.mrb[0].mxu0
        %v621 = vpop.f32.mrb[0].mxu0
        %622 = vdwg.mxu0
        %624 = vrot.lane.b32.xlu0 %v514, 120
        %v625 = vpop.permute.xlu0 %624
        %v627 = vunpack.c.l.b16 %v515
        %v628 = vpack.c.b16 %v627, %v627
        %629 = vrot.lane.b32.xlu0 %v628, 120
        %v630 = vpop.permute.xlu0 %629
        %v632 = vsel %vm517, %v625, 0
        %v635 = vsel %vm517, %v630, 0
        %637 = vmatprep.subr.bf16.mxu0 0
        %638 = vmatpush1.bf16.xpose.msra.mxu0 %v635
        %639 = vmatprep.subr.bf16.mxu0 0
        %640 = vmatpush1.bf16.xpose.msra.mxu0 0
        %641 = vmatprep.subr.bf16.mxu0 0
        %642 = vmatpush1.bf16.xpose.msra.mxu0 0
        %643 = vmatprep.subr.bf16.mxu0 0
        %644 = vmatpush1.bf16.xpose.msra.mxu0 0
        %645 = vmatprep.subr.bf16.mxu0 0
        %646 = vmatpush1.bf16.xpose.msra.mxu0 0
        %647 = vmatprep.subr.bf16.mxu0 0
        %648 = vmatpush1.bf16.xpose.msra.mxu0 0
        %649 = vmatprep.subr.bf16.mxu0 0
        %650 = vmatpush1.bf16.xpose.msra.mxu0 0
        %651 = vmatprep.subr.bf16.mxu0 0
        %652 = vmatpush1.bf16.xpose.msra.mxu0 0
        %653 = vmatprep.subr.bf16.mxu0 0
        %654 = vmatpush1.bf16.xpose.msra.mxu0 0
        %655 = vmatprep.subr.bf16.mxu0 0
        %656 = vmatpush1.bf16.xpose.msra.mxu0 0
        %657 = vmatprep.subr.bf16.mxu0 0
        %658 = vmatpush1.bf16.xpose.msra.mxu0 0
        %659 = vmatprep.subr.bf16.mxu0 0
        %660 = vmatpush1.bf16.xpose.msra.mxu0 0
        %661 = vmatprep.subr.bf16.mxu0 0
        %662 = vmatpush1.bf16.xpose.msra.mxu0 0
        %663 = vmatprep.subr.bf16.mxu0 0
        %664 = vmatpush1.bf16.xpose.msra.mxu0 0
        %665 = vmatprep.subr.bf16.mxu0 0
        %666 = vmatpush1.bf16.xpose.msra.mxu0 0
        %667 = vmatprep.subr.bf16.mxu0 0
        %668 = vmatpush1.bf16.xpose.msra.mxu0 0
        %669 = vmatprep.mubr.bf16.mxu0 0
        %670 = vmatmul.mubr.bf16.gmra.mrb[0].mxu0 %v632
        %v671 = vpop.f32.mrb[0].mxu0
        %v672 = vadd.f32 0.0, %v671
        %v673 = vpop.f32.mrb[0].mxu0
        %v674 = vpop.f32.mrb[0].mxu0
        %v675 = vpop.f32.mrb[0].mxu0
        %676 = vdwg.mxu0
        %v677 = vsel %vm517, %v672, -inf
        %678 = vmax.xlane.f32.xlu0 %v677
        %v679 = vpop.xlane.xlu0 %678
        %v680 = vsub.f32 %v672, %v679
        %v681 = vmul.f32 %v680, 1.442695
        %v682 = vpow.pop %v681
        %v683 = vsel %vm517, %v682, 0.0
        %684 = vadd.xlane.f32.xlu0 %v683
        %v685 = vpop.xlane.xlu0 %684
        %v686 = vrcp.pop %v685
        %v687 = vmul.f32 %v682, %v686
        %v688 = vpack.c.bf16 %v687, %v687
        %v690 = vunpack.c.l.b16 %v516
        %v691 = vpack.c.b16 %v690, %v690
        %692 = vrot.lane.b32.xlu0 %v691, 120
        %v693 = vpop.permute.xlu0 %692
        %v695 = vsel %vm517, %v688, 0
        %v698 = vsel %vm579, %v693, 0
        %700 = vmatprep.subr.bf16.mxu0 0
        %701 = vmatpush1.bf16.msra.mxu0 %v698
        %702 = vmatprep.subr.bf16.mxu0 0
        %703 = vmatpush1.bf16.msra.mxu0 0
        %704 = vmatprep.subr.bf16.mxu0 0
        %705 = vmatpush1.bf16.msra.mxu0 0
        %706 = vmatprep.subr.bf16.mxu0 0
        %707 = vmatpush1.bf16.msra.mxu0 0
        %708 = vmatprep.subr.bf16.mxu0 0
        %709 = vmatpush1.bf16.msra.mxu0 0
        %710 = vmatprep.subr.bf16.mxu0 0
        %711 = vmatpush1.bf16.msra.mxu0 0
        %712 = vmatprep.subr.bf16.mxu0 0
        %713 = vmatpush1.bf16.msra.mxu0 0
        %714 = vmatprep.subr.bf16.mxu0 0
        %715 = vmatpush1.bf16.msra.mxu0 0
        %716 = vmatprep.subr.bf16.mxu0 0
        %717 = vmatpush1.bf16.msra.mxu0 0
        %718 = vmatprep.subr.bf16.mxu0 0
        %719 = vmatpush1.bf16.msra.mxu0 0
        %720 = vmatprep.subr.bf16.mxu0 0
        %721 = vmatpush1.bf16.msra.mxu0 0
        %722 = vmatprep.subr.bf16.mxu0 0
        %723 = vmatpush1.bf16.msra.mxu0 0
        %724 = vmatprep.subr.bf16.mxu0 0
        %725 = vmatpush1.bf16.msra.mxu0 0
        %726 = vmatprep.subr.bf16.mxu0 0
        %727 = vmatpush1.bf16.msra.mxu0 0
        %728 = vmatprep.subr.bf16.mxu0 0
        %729 = vmatpush1.bf16.msra.mxu0 0
        %730 = vmatprep.subr.bf16.mxu0 0
        %731 = vmatpush1.bf16.msra.mxu0 0
        %732 = vmatprep.mubr.bf16.mxu0 0
        %733 = vmatmul.mubr.bf16.gmra.mrb[0].mxu0 %v695
        %v734 = vpop.f32.mrb[0].mxu0
        %v735 = vadd.f32 0.0, %v734
        %v736 = vpop.f32.mrb[0].mxu0
        %v737 = vpop.f32.mrb[0].mxu0
        %v738 = vpop.f32.mrb[0].mxu0
        %739 = vdwg.mxu0
        %740 = vrot.lane.b32.xlu0 %v514, 112
        %v741 = vpop.permute.xlu0 %740
        %742 = vrot.lane.b32.xlu0 %v628, 112
        %v743 = vpop.permute.xlu0 %742
        %v745 = vsel %vm517, %v741, 0
        %v748 = vsel %vm517, %v743, 0
        %750 = vmatprep.subr.bf16.mxu0 0
        %751 = vmatpush1.bf16.xpose.msra.mxu0 %v748
        %752 = vmatprep.subr.bf16.mxu0 0
        %753 = vmatpush1.bf16.xpose.msra.mxu0 0
        %754 = vmatprep.subr.bf16.mxu0 0
        %755 = vmatpush1.bf16.xpose.msra.mxu0 0
        %756 = vmatprep.subr.bf16.mxu0 0
        %757 = vmatpush1.bf16.xpose.msra.mxu0 0
        %758 = vmatprep.subr.bf16.mxu0 0
        %759 = vmatpush1.bf16.xpose.msra.mxu0 0
        %760 = vmatprep.subr.bf16.mxu0 0
        %761 = vmatpush1.bf16.xpose.msra.mxu0 0
        %762 = vmatprep.subr.bf16.mxu0 0
        %763 = vmatpush1.bf16.xpose.msra.mxu0 0
        %764 = vmatprep.subr.bf16.mxu0 0
        %765 = vmatpush1.bf16.xpose.msra.mxu0 0
        %766 = vmatprep.subr.bf16.mxu0 0
        %767 = vmatpush1.bf16.xpose.msra.mxu0 0
        %768 = vmatprep.subr.bf16.mxu0 0
        %769 = vmatpush1.bf16.xpose.msra.mxu0 0
        %770 = vmatprep.subr.bf16.mxu0 0
        %771 = vmatpush1.bf16.xpose.msra.mxu0 0
        %772 = vmatprep.subr.bf16.mxu0 0
        %773 = vmatpush1.bf16.xpose.msra.mxu0 0
        %774 = vmatprep.subr.bf16.mxu0 0
        %775 = vmatpush1.bf16.xpose.msra.mxu0 0
        %776 = vmatprep.subr.bf16.mxu0 0
        %777 = vmatpush1.bf16.xpose.msra.mxu0 0
        %778 = vmatprep.subr.bf16.mxu0 0
        %779 = vmatpush1.bf16.xpose.msra.mxu0 0
        %780 = vmatprep.subr.bf16.mxu0 0
        %781 = vmatpush1.bf16.xpose.msra.mxu0 0
        %782 = vmatprep.mubr.bf16.mxu0 0
        %783 = vmatmul.mubr.bf16.gmra.mrb[0].mxu0 %v745
        %v784 = vpop.f32.mrb[0].mxu0
        %v785 = vadd.f32 0.0, %v784
        %v786 = vpop.f32.mrb[0].mxu0
        %v787 = vpop.f32.mrb[0].mxu0
        %v788 = vpop.f32.mrb[0].mxu0
        %789 = vdwg.mxu0
        %v790 = vsel %vm517, %v785, -inf
        %791 = vmax.xlane.f32.xlu0 %v790
        %v792 = vpop.xlane.xlu0 %791
        %v793 = vsub.f32 %v785, %v792
        %v794 = vmul.f32 %v793, 1.442695
        %v795 = vpow.pop %v794
        %v796 = vsel %vm517, %v795, 0.0
        %797 = vadd.xlane.f32.xlu0 %v796
        %v798 = vpop.xlane.xlu0 %797
        %v799 = vrcp.pop %v798
        %v800 = vmul.f32 %v795, %v799
        %v801 = vpack.c.bf16 %v800, %v800
        %802 = vrot.lane.b32.xlu0 %v691, 112
        %v803 = vpop.permute.xlu0 %802
        %v805 = vsel %vm517, %v801, 0
        %v808 = vsel %vm579, %v803, 0
        %810 = vmatprep.subr.bf16.mxu0 0
        %811 = vmatpush1.bf16.msra.mxu0 %v808
        %812 = vmatprep.subr.bf16.mxu0 0
        %813 = vmatpush1.bf16.msra.mxu0 0
        %814 = vmatprep.subr.bf16.mxu0 0
        %815 = vmatpush1.bf16.msra.mxu0 0
        %816 = vmatprep.subr.bf16.mxu0 0
        %817 = vmatpush1.bf16.msra.mxu0 0
        %818 = vmatprep.subr.bf16.mxu0 0
        %819 = vmatpush1.bf16.msra.mxu0 0
        %820 = vmatprep.subr.bf16.mxu0 0
        %821 = vmatpush1.bf16.msra.mxu0 0
        %822 = vmatprep.subr.bf16.mxu0 0
        %823 = vmatpush1.bf16.msra.mxu0 0
        %824 = vmatprep.subr.bf16.mxu0 0
        %825 = vmatpush1.bf16.msra.mxu0 0
        %826 = vmatprep.subr.bf16.mxu0 0
        %827 = vmatpush1.bf16.msra.mxu0 0
        %828 = vmatprep.subr.bf16.mxu0 0
        %829 = vmatpush1.bf16.msra.mxu0 0
        %830 = vmatprep.subr.bf16.mxu0 0
        %831 = vmatpush1.bf16.msra.mxu0 0
        %832 = vmatprep.subr.bf16.mxu0 0
        %833 = vmatpush1.bf16.msra.mxu0 0
        %834 = vmatprep.subr.bf16.mxu0 0
        %835 = vmatpush1.bf16.msra.mxu0 0
        %836 = vmatprep.subr.bf16.mxu0 0
        %837 = vmatpush1.bf16.msra.mxu0 0
        %838 = vmatprep.subr.bf16.mxu0 0
        %839 = vmatpush1.bf16.msra.mxu0 0
        %840 = vmatprep.subr.bf16.mxu0 0
        %841 = vmatpush1.bf16.msra.mxu0 0
        %842 = vmatprep.mubr.bf16.mxu0 0
        %843 = vmatmul.mubr.bf16.gmra.mrb[0].mxu0 %v805
        %v844 = vpop.f32.mrb[0].mxu0
        %v845 = vadd.f32 0.0, %v844
        %v846 = vpop.f32.mrb[0].mxu0
        %v847 = vpop.f32.mrb[0].mxu0
        %v848 = vpop.f32.mrb[0].mxu0
        %849 = vdwg.mxu0
        %850 = vrot.lane.b32.xlu0 %v514, 104
        %v851 = vpop.permute.xlu0 %850
        %852 = vrot.lane.b32.xlu0 %v628, 104
        %v853 = vpop.permute.xlu0 %852
        %v855 = vsel %vm517, %v851, 0
        %v858 = vsel %vm517, %v853, 0
        %860 = vmatprep.subr.bf16.mxu0 0
        %861 = vmatpush1.bf16.xpose.msra.mxu0 %v858
        %862 = vmatprep.subr.bf16.mxu0 0
        %863 = vmatpush1.bf16.xpose.msra.mxu0 0
        %864 = vmatprep.subr.bf16.mxu0 0
        %865 = vmatpush1.bf16.xpose.msra.mxu0 0
        %866 = vmatprep.subr.bf16.mxu0 0
        %867 = vmatpush1.bf16.xpose.msra.mxu0 0
        %868 = vmatprep.subr.bf16.mxu0 0
        %869 = vmatpush1.bf16.xpose.msra.mxu0 0
        %870 = vmatprep.subr.bf16.mxu0 0
        %871 = vmatpush1.bf16.xpose.msra.mxu0 0
        %872 = vmatprep.subr.bf16.mxu0 0
        %873 = vmatpush1.bf16.xpose.msra.mxu0 0
        %874 = vmatprep.subr.bf16.mxu0 0
        %875 = vmatpush1.bf16.xpose.msra.mxu0 0
        %876 = vmatprep.subr.bf16.mxu0 0
        %877 = vmatpush1.bf16.xpose.msra.mxu0 0
        %878 = vmatprep.subr.bf16.mxu0 0
        %879 = vmatpush1.bf16.xpose.msra.mxu0 0
        %880 = vmatprep.subr.bf16.mxu0 0
        %881 = vmatpush1.bf16.xpose.msra.mxu0 0
        %882 = vmatprep.subr.bf16.mxu0 0
        %883 = vmatpush1.bf16.xpose.msra.mxu0 0
        %884 = vmatprep.subr.bf16.mxu0 0
        %885 = vmatpush1.bf16.xpose.msra.mxu0 0
        %886 = vmatprep.subr.bf16.mxu0 0
        %887 = vmatpush1.bf16.xpose.msra.mxu0 0
        %888 = vmatprep.subr.bf16.mxu0 0
        %889 = vmatpush1.bf16.xpose.msra.mxu0 0
        %890 = vmatprep.subr.bf16.mxu0 0
        %891 = vmatpush1.bf16.xpose.msra.mxu0 0
        %892 = vmatprep.mubr.bf16.mxu0 0
        %893 = vmatmul.mubr.bf16.gmra.mrb[0].mxu0 %v855
        %v894 = vpop.f32.mrb[0].mxu0
        %v895 = vadd.f32 0.0, %v894
        %v896 = vpop.f32.mrb[0].mxu0
        %v897 = vpop.f32.mrb[0].mxu0
        %v898 = vpop.f32.mrb[0].mxu0
        %899 = vdwg.mxu0
        %v900 = vsel %vm517, %v895, -inf
        %901 = vmax.xlane.f32.xlu0 %v900
        %v902 = vpop.xlane.xlu0 %901
        %v903 = vsub.f32 %v895, %v902
        %v904 = vmul.f32 %v903, 1.442695
        %v905 = vpow.pop %v904
        %v906 = vsel %vm517, %v905, 0.0
        %907 = vadd.xlane.f32.xlu0 %v906
        %v908 = vpop.xlane.xlu0 %907
        %v909 = vrcp.pop %v908
        %v910 = vmul.f32 %v905, %v909
        %v911 = vpack.c.bf16 %v910, %v910
        %912 = vrot.lane.b32.xlu0 %v691, 104
        %v913 = vpop.permute.xlu0 %912
        %v915 = vsel %vm517, %v911, 0
        %v918 = vsel %vm579, %v913, 0
        %920 = vmatprep.subr.bf16.mxu0 0
        %921 = vmatpush1.bf16.msra.mxu0 %v918
        %922 = vmatprep.subr.bf16.mxu0 0
        %923 = vmatpush1.bf16.msra.mxu0 0
        %924 = vmatprep.subr.bf16.mxu0 0
        %925 = vmatpush1.bf16.msra.mxu0 0
        %926 = vmatprep.subr.bf16.mxu0 0
        %927 = vmatpush1.bf16.msra.mxu0 0
        %928 = vmatprep.subr.bf16.mxu0 0
        %929 = vmatpush1.bf16.msra.mxu0 0
        %930 = vmatprep.subr.bf16.mxu0 0
        %931 = vmatpush1.bf16.msra.mxu0 0
        %932 = vmatprep.subr.bf16.mxu0 0
        %933 = vmatpush1.bf16.msra.mxu0 0
        %934 = vmatprep.subr.bf16.mxu0 0
        %935 = vmatpush1.bf16.msra.mxu0 0
        %936 = vmatprep.subr.bf16.mxu0 0
        %937 = vmatpush1.bf16.msra.mxu0 0
        %938 = vmatprep.subr.bf16.mxu0 0
        %939 = vmatpush1.bf16.msra.mxu0 0
        %940 = vmatprep.subr.bf16.mxu0 0
        %941 = vmatpush1.bf16.msra.mxu0 0
        %942 = vmatprep.subr.bf16.mxu0 0
        %943 = vmatpush1.bf16.msra.mxu0 0
        %944 = vmatprep.subr.bf16.mxu0 0
        %945 = vmatpush1.bf16.msra.mxu0 0
        %946 = vmatprep.subr.bf16.mxu0 0
        %947 = vmatpush1.bf16.msra.mxu0 0
        %948 = vmatprep.subr.bf16.mxu0 0
        %949 = vmatpush1.bf16.msra.mxu0 0
        %950 = vmatprep.subr.bf16.mxu0 0
        %951 = vmatpush1.bf16.msra.mxu0 0
        %952 = vmatprep.mubr.bf16.mxu0 0
        %953 = vmatmul.mubr.bf16.gmra.mrb[0].mxu0 %v915
        %v954 = vpop.f32.mrb[0].mxu0
        %v955 = vadd.f32 0.0, %v954
        %v956 = vpop.f32.mrb[0].mxu0
        %v957 = vpop.f32.mrb[0].mxu0
        %v958 = vpop.f32.mrb[0].mxu0
        %959 = vdwg.mxu0
        %961 = vrot.lane.b32.xlu0 %v735, 8
        %v962 = vpop.permute.xlu0 %961
        %965 = vrot.lane.b32.xlu0 %v845, 16
        %v966 = vpop.permute.xlu0 %965
        %969 = vrot.lane.b32.xlu0 %v955, 24
        %v970 = vpop.permute.xlu0 %969
        %v972 = vsel %vm517, %v618, %v962
        %vm973 = vcmask 130048
        %v974 = vsel %vm973, %v972, %v966
        %vm975 = vcmask 195584
        %v976 = vsel %vm975, %v974, %v970
        %977 = vst.msk [vmem:[%s315] sm:$0xff] %vm469, %v976
        %s978 = sand.u32 %s148, 1
        %s979 = scalar_lea.sflag [#allocation6], %s978
        %s980 = sand.u32 %s148, 1
        %s981 = smul.addr %s980, 8
        %s982 = scalar_lea.vmem [#allocation12], %s981
        // Predicated region
        $region57: #{tpu_custom_call.1} parent=35 // pred_check
          %p983 = pneg %p158
        $region58: #{tpu_custom_call.1} parent=35 // pred_check_branch
          %985 = sbr.rel (%p983) target = $region60
        $region59: #{tpu_custom_call.1} parent=35 // pred_region
          %s987 = ssub.s32 128, 128
          %988 = vsyncadd %s979, %s987
          %s989 = sadd.s32 %s30, %s29
          %s990 = smul.addr %s989, 128
          %s991 = scalar_lea.hbm %s4, %s990
          %s993 = sshll.u32 %s982, 4
          %s994 = int_to_ptr.vmem [resolvable:$true] %s993
          %996 = dma.vmem_to_hbm [thread:$0]  %s994, 128, %s991, %s979
        $region60: #{tpu_custom_call.1} parent=35 // pred_fallthru
          _
      $region36: #{tpu_custom_call.1} parent=5 // pred_fallthru
        _
      %p997 = scmp.le.s32.totalorder 2, %s20
      // Predicated region
      $region61: #{tpu_custom_call.1} parent=5 // pred_check
        %p998 = pneg %p997
      $region62: #{tpu_custom_call.1} parent=5 // pred_check_branch
        %1000 = sbr.rel (%p998) target = $region64
      $region63: #{tpu_custom_call.1} parent=5 // pred_region
        %s1001 = ssub.s32 %s20, 2
        // Predicated region
        $region65: #{tpu_custom_call.1} parent=63 // pred_check
          %p1002 = pneg %p164
        $region66: #{tpu_custom_call.1} parent=63 // pred_check_branch
          %1004 = sbr.rel (%p1002) target = $region68
        $region67: #{tpu_custom_call.1} parent=63 // pred_region
          %s1005 = sand.u32 %s149, 1
          %s1006 = scalar_lea.sflag [#allocation6], %s1005
          %s1007 = sand.u32 %s149, 1
          %s1008 = smul.addr %s1007, 8
          %s1009 = scalar_lea.vmem [#allocation12], %s1008
          %1010 = dma.done %s1006, 128
        $region68: #{tpu_custom_call.1} parent=63 // pred_fallthru
          _
      $region64: #{tpu_custom_call.1} parent=5 // pred_fallthru
        _
    $region6: #{tpu_custom_call.1} parent=1 // loop_footer
      %s24 = sadd.s32 1, %s20
    $region7: #{tpu_custom_call.1} parent=1 // loop_footer_branch
      %19 = sbr.rel target = $region3
    $region8: #{tpu_custom_call.1} parent=1 // loop_exit
      _
    %1011 = vsyncpa [#allocation5], 1
    %s1012 = scalar_lea.sflag [#allocation5], 1
    %1013 = vsyncpa %s1012, 1
    %1014 = vsyncpa [#allocation8], 1
    %s1015 = scalar_lea.sflag [#allocation8], 1
    %1016 = vsyncpa %s1015, 1
    %1017 = vsyncpa [#allocation11], 1
    %1018 = vsyncpa [#allocation6], 1
    %s1019 = scalar_lea.sflag [#allocation6], 1
    %1020 = vsyncpa %s1019, 1

</llo_original>
